<compile_context>
chip_gen: v5e
topology: v5e:2x2
jax: 0.10.0
libtpu: 0.0.40
codegen_flags: <defaults>
</compile_context>

<pallas_src>
import functools
import math
from functools import partial

import jax
import jax.numpy as jnp
from jax.experimental import pallas as pl
from jax.experimental.pallas import tpu as pltpu


# ---------------------------------------------------------------------------
# fused conv3x3('same') + bias + PReLU kernel
# ---------------------------------------------------------------------------

def _conv3x3_bias_prelu_kernel(p_ref, w_ref, b_ref, a_ref, o_ref):
    # p_ref: (1, K, PT)    bf16  im2col patches for one image / spatial tile
    # w_ref: (Cout, K)     bf16  flattened conv weight
    # b_ref: (Cout, 1)     f32   bias (broadcast over the lane dim)
    # a_ref: (1,)          f32   scalar PReLU slope (SMEM)
    # o_ref: (1, Cout, PT)       conv + bias + PReLU output (lane-dense PT)
    acc = jnp.dot(w_ref[...], p_ref[0],
                  preferred_element_type=jnp.float32)        # MXU, f32 accum
    acc = acc + b_ref[...]                                    # VPU epilogue
    alpha = a_ref[0]                                          # scalar (SMEM)
    y = jnp.where(acc >= 0.0, acc, alpha * acc)               # fused PReLU
    o_ref[0] = y.astype(o_ref.dtype)


@functools.lru_cache(maxsize=None)
def _vmem_limit_bytes():
    cap = 64 * 1024 * 1024
    try:
        cap = int(pltpu.get_tpu_info().vmem_capacity_bytes)
    except Exception:
        pass
    # leave double-buffer headroom: ~48 MiB on v7x (64 MiB VMEM),
    # 96 MiB on v5e/v6e (128 MiB VMEM)
    return int(min(cap * 3 // 4, 96 * 1024 * 1024))


def _im2col_3x3(x):
    """x: (N, C, H, W) -> patches (N, C*9, H*W), tap order (c, kh, kw)."""
    N, C, H, W = x.shape
    xp = jnp.pad(x, ((0, 0), (0, 0), (1, 1), (1, 1)))
    taps = [xp[:, :, kh:kh + H, kw:kw + W]
            for kh in range(3) for kw in range(3)]
    p = jnp.stack(taps, axis=2)                   # (N, C, 9, H, W)
    return p.reshape(N, C * 9, H * W)


def _spatial_tile(hw):
    # lane-dense spatial tile: largest 128-multiple that divides H*W
    for cand in (4096, 2048, 1024, 512, 256, 128):
        if hw % cand == 0:
            return cand
    return hw                                     # full-dim block fallback


def conv3x3_bias_prelu(x, w, b, alpha, out_dtype=jnp.float32):
    """Fused 'same' 3x3 conv + bias + PReLU(scalar alpha).  NCHW layout."""
    N, Cin, H, W = x.shape
    Cout = w.shape[0]
    K = Cin * 9
    HW = H * W

    patches = _im2col_3x3(x.astype(jnp.bfloat16))            # (N, K, HW) bf16
    w_mat = w.reshape(Cout, K).astype(jnp.bfloat16)
    b_col = b.astype(jnp.float32).reshape(Cout, 1)
    a_arr = jnp.asarray(alpha, jnp.float32).reshape(1)

    pt = _spatial_tile(HW)
    grid = (N, HW // pt)

    out = pl.pallas_call(
        _conv3x3_bias_prelu_kernel,
        out_shape=jax.ShapeDtypeStruct((N, Cout, HW), out_dtype),
        grid=grid,
        in_specs=[
            pl.BlockSpec((1, K, pt), lambda n, p: (n, 0, p)),
            pl.BlockSpec((Cout, K), lambda n, p: (0, 0)),
            pl.BlockSpec((Cout, 1), lambda n, p: (0, 0)),
            pl.BlockSpec(memory_space=pltpu.MemorySpace.SMEM),
        ],
        out_specs=pl.BlockSpec((1, Cout, pt), lambda n, p: (n, 0, p)),
        compiler_params=pltpu.CompilerParams(
            dimension_semantics=("parallel", "parallel"),
            vmem_limit_bytes=_vmem_limit_bytes()),
    )(patches, w_mat, b_col, a_arr)
    return out.reshape(N, Cout, H, W)


# ---------------------------------------------------------------------------
# pure-layout glue (left to XLA)
# ---------------------------------------------------------------------------

def pixel_shuffle_nchw(x, r):
    """torch.nn.PixelShuffle(r) in NCHW: (N, C*r*r, H, W) -> (N, C, rH, rW)."""
    N, Crr, H, W = x.shape
    C = Crr // (r * r)
    x = x.reshape(N, C, r, r, H, W)
    x = jnp.transpose(x, (0, 1, 4, 2, 5, 3))
    return x.reshape(N, C, H * r, W * r)


# ---------------------------------------------------------------------------
# Upsample module: params + forward
# ---------------------------------------------------------------------------

def init_upsample(key, in_channel, scale_factor):
    expansion = scale_factor ** 2
    n_stages = int(round(math.log(scale_factor, 2)))
    stages = []
    keys = jax.random.split(key, max(n_stages, 1))
    for i in range(n_stages):
        wk, bk = jax.random.split(keys[i])
        cout = expansion * in_channel
        fan_in = in_channel * 3 * 3
        bound = 1.0 / math.sqrt(fan_in)
        w = jax.random.uniform(wk, (cout, in_channel, 3, 3), jnp.float32,
                               -bound, bound)
        b = jax.random.uniform(bk, (cout,), jnp.float32, -bound, bound)
        stages.append({"w": w, "b": b, "alpha": jnp.float32(0.25)})
    return stages


def upsample_forward(params, x, scale_factor):
    # PyTorch order per stage: Conv2d -> PixelShuffle -> PReLU.  The PReLU
    # slope is a scalar, so it commutes with the PixelShuffle permutation and
    # is fused into the conv kernel epilogue.  Intermediate stage activations
    # are stored as bf16 (next stage recasts to bf16 anyway); only the final
    # stage output is f32.
    n_stages = len(params)
    for i, st in enumerate(params):
        out_dtype = jnp.float32 if i == n_stages - 1 else jnp.bfloat16
        y = conv3x3_bias_prelu(x, st["w"], st["b"], st["alpha"], out_dtype)
        x = pixel_shuffle_nchw(y, scale_factor)
    return x


# pure-JAX reference (bf16-matched) for a correctness sanity check
def upsample_reference(params, x, scale_factor):
    for st in params:
        y = jax.lax.conv_general_dilated(
            x.astype(jnp.bfloat16), st["w"].astype(jnp.bfloat16),
            window_strides=(1, 1), padding=((1, 1), (1, 1)),
            dimension_numbers=("NCHW", "OIHW", "NCHW"),
            preferred_element_type=jnp.float32)
        y = y + st["b"].reshape(1, -1, 1, 1)
        y = pixel_shuffle_nchw(y, scale_factor)
        x = jnp.where(y >= 0.0, y, st["alpha"] * y)
    return x


# ---------------------------------------------------------------------------
# main
# ---------------------------------------------------------------------------

if __name__ == "__main__":
    in_channel = 4
    key = jax.random.PRNGKey(0)
    pk2, pk4, xk = jax.random.split(key, 3)
    x = jax.random.normal(xk, (2, in_channel, 16, 16), jnp.float32)  # NCHW

    # scale_factor = 2 : one (conv -> shuffle -> prelu) stage
    params2 = init_upsample(pk2, in_channel, 2)
    fwd2 = jax.jit(partial(upsample_forward, scale_factor=2))
    y2 = fwd2(params2, x)
    jax.block_until_ready(y2)
    assert y2.shape == (2, in_channel, 32, 32) and y2.dtype == jnp.float32
    ref2 = upsample_reference(params2, x, 2)
    assert float(jnp.max(jnp.abs(y2 - ref2))) < 3e-2

    # scale_factor = 4 : two stages (log2(4)=2, PixelShuffle(4) each), which
    # also exercises the larger spatial extent at the second stage.
    params4 = init_upsample(pk4, in_channel, 4)
    fwd4 = jax.jit(partial(upsample_forward, scale_factor=4))
    y4 = fwd4(params4, x)
    jax.block_until_ready(y4)
    assert y4.shape == (2, in_channel, 256, 256) and y4.dtype == jnp.float32
    ref4 = upsample_reference(params4, x, 4)
    assert float(jnp.max(jnp.abs(y4 - ref4))) < 3e-2

    print("KERNEL_OK")
</pallas_src>

<mosaic_0001>
module attributes {stable_mosaic.version = 11 : i64} {
  func.func @_conv3x3_bias_prelu_kernel(%arg0: i32, %arg1: i32, %arg2: memref<1x36x256xbf16, #tpu.memory_space<vmem>>, %arg3: memref<16x36xbf16, #tpu.memory_space<vmem>>, %arg4: memref<16x1xf32, #tpu.memory_space<vmem>>, %arg5: memref<1xf32, #tpu.memory_space<smem>>, %arg6: memref<1x16x256xf32, #tpu.memory_space<vmem>>) attributes {dimension_semantics = [#tpu.dimension_semantics<parallel>, #tpu.dimension_semantics<parallel>], iteration_bounds = array<i64: 2, 1>, scalar_prefetch = 0 : i64, scratch_operands = 0 : i64, tpu.core_type = #tpu.core_type<tc>, window_params = [{transform_indices = @transform_0, window_bounds = array<i64: 1, 36, 256>}, {pipeline_mode = #tpu.pipeline_mode<synchronous>, transform_indices = @transform_1, window_bounds = array<i64: 16, 36>}, {pipeline_mode = #tpu.pipeline_mode<synchronous>, transform_indices = @transform_2, window_bounds = array<i64: 16, 1>}, {transform_indices = @transform_3, window_bounds = array<i64: 1>}, {transform_indices = @transform_4, window_bounds = array<i64: 1, 16, 256>}]} {
    %c0 = arith.constant 0 : index
    %c0_0 = arith.constant 0 : index
    %0 = vector.load %arg3[%c0, %c0_0] : memref<16x36xbf16, #tpu.memory_space<vmem>>, vector<16x36xbf16>
    %c0_1 = arith.constant 0 : index
    %c0_2 = arith.constant 0 : index
    %c0_3 = arith.constant 0 : index
    %1 = vector.load %arg2[%c0_1, %c0_2, %c0_3] : memref<1x36x256xbf16, #tpu.memory_space<vmem>>, vector<1x36x256xbf16>
    %2 = vector.shape_cast %1 : vector<1x36x256xbf16> to vector<36x256xbf16>
    %cst = arith.constant dense<0.000000e+00> : vector<16x256xf32>
    %3 = tpu.matmul %0, %2, %cst {dimension_numbers = #tpu.dot_dimension_numbers<[1], [0], [0], [1], [0, 0, 1, 1], [], []>} : vector<16x36xbf16>, vector<36x256xbf16>, vector<16x256xf32> -> vector<16x256xf32>
    %c0_4 = arith.constant 0 : index
    %c0_5 = arith.constant 0 : index
    %4 = vector.load %arg4[%c0_4, %c0_5] : memref<16x1xf32, #tpu.memory_space<vmem>>, vector<16x1xf32>
    %5 = vector.broadcast %4 : vector<16x1xf32> to vector<16x256xf32>
    %6 = arith.addf %3, %5 : vector<16x256xf32>
    %c0_6 = arith.constant 0 : index
    %7 = memref.load %arg5[%c0_6] : memref<1xf32, #tpu.memory_space<smem>>
    %cst_7 = arith.constant 0.000000e+00 : f32
    %8 = vector.broadcast %cst_7 : f32 to vector<16x256xf32>
    %9 = arith.cmpf oge, %6, %8 : vector<16x256xf32>
    %10 = vector.broadcast %7 : f32 to vector<16x256xf32>
    %11 = arith.mulf %10, %6 : vector<16x256xf32>
    %12 = arith.select %9, %6, %11 : vector<16x256xi1>, vector<16x256xf32>
    %c0_8 = arith.constant 0 : index
    %c0_9 = arith.constant 0 : index
    %c0_10 = arith.constant 0 : index
    %13 = vector.load %arg6[%c0_8, %c0_9, %c0_10] : memref<1x16x256xf32, #tpu.memory_space<vmem>>, vector<1x16x256xf32>
    %14 = vector.shape_cast %13 : vector<1x16x256xf32> to vector<16x256xf32>
    %15 = vector.shape_cast %12 : vector<16x256xf32> to vector<1x16x256xf32>
    tpu.vector_store %arg6[%c0_8, %c0_9, %c0_10], %15 {strides = array<i32>} : memref<1x16x256xf32, #tpu.memory_space<vmem>>, vector<1x16x256xf32>,
    return
  }
  func.func @transform_0(%arg0: i32, %arg1: i32) -> (i32, i32, i32) {
    %c0_i32 = arith.constant 0 : i32
    %c0_i32_0 = arith.constant 0 : i32
    return %arg0, %c0_i32, %arg1 : i32, i32, i32
  }
  func.func @transform_1(%arg0: i32, %arg1: i32) -> (i32, i32) {
    %c0_i32 = arith.constant 0 : i32
    %c0_i32_0 = arith.constant 0 : i32
    %c0_i32_1 = arith.constant 0 : i32
    return %c0_i32, %c0_i32_0 : i32, i32
  }
  func.func @transform_2(%arg0: i32, %arg1: i32) -> (i32, i32) {
    %c0_i32 = arith.constant 0 : i32
    %c0_i32_0 = arith.constant 0 : i32
    %c0_i32_1 = arith.constant 0 : i32
    return %c0_i32, %c0_i32_0 : i32, i32
  }
  func.func @transform_3(%arg0: i32, %arg1: i32) -> i32 {
    %c0_i32 = arith.constant 0 : i32
    %c0_i32_0 = arith.constant 0 : i32
    return %c0_i32 : i32
  }
  func.func @transform_4(%arg0: i32, %arg1: i32) -> (i32, i32, i32) {
    %c0_i32 = arith.constant 0 : i32
    %c0_i32_0 = arith.constant 0 : i32
    return %arg0, %c0_i32, %arg1 : i32, i32, i32
  }
}

</mosaic_0001>

<llo_original>
// kernel: upsample_forward.1
$region0: #{upsample_forward.1}
  #allocation0 [shape = 'u32[]', space=smem, size = 0x4, offset = 0x4, fixed_abs, tag = 'smem constant byte address 0x4 - core index']
  #allocation1 [shape = 'u32[72,128]{1,0:T(1,128)}', space=vmem, size = 0x9000, scoped, tag = 'internal scratch']
  #allocation2 [shape = 'f32[1]{0:T(128)S(6)}', space=smem, size = 0x200, scoped, tag = 'scoped memory for upsample_forward.1']
  %s0 = inlined_call_operand.vmem [shape: bf16[2,36,256], index: 0, kind: input, shape index: {}]
  %s1 = inlined_call_operand.vmem [shape: bf16[16,36], index: 1, kind: input, shape index: {}]
  %s2 = inlined_call_operand.vmem [shape: f32[16,1], index: 2, kind: input, shape index: {}]
  %s3 = inlined_call_operand.<no memory space> [shape: f32[1], index: 3, kind: input, shape index: {}]
  %s4 = inlined_call_operand.vmem [shape: f32[2,16,256], index: 4, kind: output, shape index: {}]
  %s5 = sld [smem:[#allocation0]]
  $region49: #{upsample_forward.1} parent=0
    _
  %s7 = ssub.s32 1, %s5
  %s8 = scalar_select 0, %s7, %s5
  %9 = sst [smem:[#allocation2]] %s3
  loop: start=0, step=1, limit=4
  $region2: #{upsample_forward.1} parent=0 // loop_pre_header
    _
  $region3: #{upsample_forward.1} parent=0 // loop_header
    %s11 = sphi 0, %s15
    %p12 = scmp.ge.s32.totalorder %s11, 4
    %s18 = sphi 0, %s30
    %s19 = sphi 0, %s26
    %s20 = sphi 0, %s18
    %s21 = sphi 0, %s19
    %s22 = sphi 0, %s20
    %s23 = sphi 0, %s21
    %s35 = sphi 0, %s37
    %s38 = sphi 0, %s35
    %s39 = sphi 0, %s38
    %s55 = sphi 0, %s39
    %s59 = sphi 0, %s59
    %s61 = sphi 0, %s59
    %s62 = sphi 0, %s61
    %s76 = sphi 0, %s62
    %s80 = sphi 0, %s80
    %s82 = sphi 0, %s80
    %s83 = sphi 0, %s82
    %s97 = sphi 0, %s83
    %s101 = sphi 0, %s101
    %s103 = sphi 0, %s101
    %s104 = sphi 0, %s103
    %s118 = sphi 0, %s104
    %s126 = sphi 0, %s128
    %s129 = sphi 0, %s126
    %s130 = sphi 0, %s129
    %s146 = sphi 0, %s130
  $region4: #{upsample_forward.1} parent=0 // loop_header_branch
    %14 = sbr.rel (%p12) target = $region8
  $region5: #{upsample_forward.1} parent=0 // loop_body
    %s16 = ssub.s32 %s11, 1
    %s17 = ssub.s32 %s11, 2
    %s24 = sadd.s32 1, %s19
    %p25 = scmp.ge.s32.totalorder %s24, 1
    %s26 = scalar_select %p25, 0, %s24
    %s27 = sadd.s32 1, %s18
    %s28 = scalar_select %p25, %s27, %s18
    %p29 = scmp.ge.s32.totalorder %s28, 2
    %s30 = scalar_select %p29, 0, %s28
    %s31 = ssub.s32 %s18, %s30
    %s32 = ssub.s32 %s19, %s26
    %s33 = sor.u32 %s31, %s32
    %p34 = scmp.eq.s32.totalorder %s33, 0
    %s36 = sadd.s32 %s35, 1
    %s37 = scalar_select %p34, %s35, %s36
    %p40 = pneg %p34
    %p41 = scmp.eq.s32.totalorder %s11, 1
    %p42 = por %p40, %p41
    %p43 = scmp.ne.s32.totalorder %s35, %s38
    %p44 = scmp.eq.s32.totalorder %s11, 0
    %p45 = por %p43, %p44
    %p46 = scmp.ne.s32.totalorder %s35, %s38
    %p47 = scmp.eq.s32.totalorder %s16, 1
    %p48 = por %p46, %p47
    %p49 = scmp.ne.s32.totalorder %s38, %s39
    %p50 = scmp.eq.s32.totalorder %s16, 0
    %p51 = por %p49, %p50
    %p52 = scmp.ne.s32.totalorder %s38, %s39
    %p53 = scmp.eq.s32.totalorder %s17, 1
    %p54 = por %p52, %p53
    %p56 = scmp.ne.s32.totalorder %s39, %s55
    %p57 = scmp.eq.s32.totalorder %s17, 0
    %p58 = por %p56, %p57
    %s60 = sadd.s32 %s59, 1
    %p63 = scmp.eq.s32.totalorder %s11, 1
    %p64 = scmp.ne.s32.totalorder %s59, %s61
    %p65 = scmp.eq.s32.totalorder %s11, 0
    %p66 = por %p64, %p65
    %p67 = scmp.ne.s32.totalorder %s59, %s61
    %p68 = scmp.eq.s32.totalorder %s16, 1
    %p69 = por %p67, %p68
    %p70 = scmp.ne.s32.totalorder %s61, %s62
    %p71 = scmp.eq.s32.totalorder %s16, 0
    %p72 = por %p70, %p71
    %p73 = scmp.ne.s32.totalorder %s61, %s62
    %p74 = scmp.eq.s32.totalorder %s17, 1
    %p75 = por %p73, %p74
    %p77 = scmp.ne.s32.totalorder %s62, %s76
    %p78 = scmp.eq.s32.totalorder %s17, 0
    %p79 = por %p77, %p78
    %s81 = sadd.s32 %s80, 1
    %p84 = scmp.eq.s32.totalorder %s11, 1
    %p85 = scmp.ne.s32.totalorder %s80, %s82
    %p86 = scmp.eq.s32.totalorder %s11, 0
    %p87 = por %p85, %p86
    %p88 = scmp.ne.s32.totalorder %s80, %s82
    %p89 = scmp.eq.s32.totalorder %s16, 1
    %p90 = por %p88, %p89
    %p91 = scmp.ne.s32.totalorder %s82, %s83
    %p92 = scmp.eq.s32.totalorder %s16, 0
    %p93 = por %p91, %p92
    %p94 = scmp.ne.s32.totalorder %s82, %s83
    %p95 = scmp.eq.s32.totalorder %s17, 1
    %p96 = por %p94, %p95
    %p98 = scmp.ne.s32.totalorder %s83, %s97
    %p99 = scmp.eq.s32.totalorder %s17, 0
    %p100 = por %p98, %p99
    %s102 = sadd.s32 %s101, 1
    %p105 = scmp.eq.s32.totalorder %s11, 1
    %p106 = scmp.ne.s32.totalorder %s101, %s103
    %p107 = scmp.eq.s32.totalorder %s11, 0
    %p108 = por %p106, %p107
    %p109 = scmp.ne.s32.totalorder %s101, %s103
    %p110 = scmp.eq.s32.totalorder %s16, 1
    %p111 = por %p109, %p110
    %p112 = scmp.ne.s32.totalorder %s103, %s104
    %p113 = scmp.eq.s32.totalorder %s16, 0
    %p114 = por %p112, %p113
    %p115 = scmp.ne.s32.totalorder %s103, %s104
    %p116 = scmp.eq.s32.totalorder %s17, 1
    %p117 = por %p115, %p116
    %p119 = scmp.ne.s32.totalorder %s104, %s118
    %p120 = scmp.eq.s32.totalorder %s17, 0
    %p121 = por %p119, %p120
    %s122 = ssub.s32 %s18, %s30
    %s123 = ssub.s32 %s19, %s26
    %s124 = sor.u32 %s122, %s123
    %p125 = scmp.eq.s32.totalorder %s124, 0
    %s127 = sadd.s32 %s126, 1
    %s128 = scalar_select %p125, %s126, %s127
    %p131 = pneg %p125
    %p132 = scmp.eq.s32.totalorder %s11, 1
    %p133 = por %p131, %p132
    %p134 = scmp.ne.s32.totalorder %s126, %s129
    %p135 = scmp.eq.s32.totalorder %s11, 0
    %p136 = por %p134, %p135
    %p137 = scmp.ne.s32.totalorder %s126, %s129
    %p138 = scmp.eq.s32.totalorder %s16, 1
    %p139 = por %p137, %p138
    %p140 = scmp.ne.s32.totalorder %s129, %s130
    %p141 = scmp.eq.s32.totalorder %s16, 0
    %p142 = por %p140, %p141
    %p143 = scmp.ne.s32.totalorder %s129, %s130
    %p144 = scmp.eq.s32.totalorder %s17, 1
    %p145 = por %p143, %p144
    %p147 = scmp.ne.s32.totalorder %s130, %s146
    %p148 = scmp.eq.s32.totalorder %s17, 0
    %p149 = por %p147, %p148
    %p150 = scmp.le.s32.totalorder 1, %s11
    %p151 = scmp.lt.s32.totalorder %s11, 3
    %p152 = pnand %p150, %p151
    %p153 = pneg %p152
    // Predicated region
    $region9: #{upsample_forward.1} parent=5 // pred_check
      _
    $region10: #{upsample_forward.1} parent=5 // pred_check_branch
      %155 = sbr.rel (%p152) target = $region12
    $region11: #{upsample_forward.1} parent=5 // pred_region
      %s156 = ssub.s32 %s11, 1
      // Predicated region
      $region13: #{upsample_forward.1} parent=11 // pred_check
        %p157 = pneg %p72
      $region14: #{upsample_forward.1} parent=11 // pred_check_branch
        %159 = sbr.rel (%p157) target = $region16
      $region15: #{upsample_forward.1} parent=11 // pred_region
        _
      $region16: #{upsample_forward.1} parent=11 // pred_fallthru
        _
      // Predicated region
      $region17: #{upsample_forward.1} parent=11 // pred_check
        %p160 = pneg %p93
      $region18: #{upsample_forward.1} parent=11 // pred_check_branch
        %162 = sbr.rel (%p160) target = $region20
      $region19: #{upsample_forward.1} parent=11 // pred_region
        _
      $region20: #{upsample_forward.1} parent=11 // pred_fallthru
        _
      // Predicated region
      $region21: #{upsample_forward.1} parent=11 // pred_check
        %p163 = pneg %p114
      $region22: #{upsample_forward.1} parent=11 // pred_check_branch
        %165 = sbr.rel (%p163) target = $region24
      $region23: #{upsample_forward.1} parent=11 // pred_region
        _
      $region24: #{upsample_forward.1} parent=11 // pred_fallthru
        _
    $region12: #{upsample_forward.1} parent=5 // pred_fallthru
      _
    %p166 = scmp.lt.s32.totalorder %s11, 2
    // Predicated region
    $region25: #{upsample_forward.1} parent=5 // pred_check
      %p167 = pneg %p166
    $region26: #{upsample_forward.1} parent=5 // pred_check_branch
      %169 = sbr.rel (%p167) target = $region28
    $region27: #{upsample_forward.1} parent=5 // pred_region
      // Predicated region
      $region29: #{upsample_forward.1} parent=27 // pred_check
        %p170 = pneg %p45
      $region30: #{upsample_forward.1} parent=27 // pred_check_branch
        %172 = sbr.rel (%p170) target = $region32
      $region31: #{upsample_forward.1} parent=27 // pred_region
        %s173 = smul.u32 2, %s19
        %p174 = scmp.lt.s32.totalorder %s18, 1
        %s175 = scalar_select %p174, %s18, 1
        %p176 = scmp.lt.s32.totalorder %s173, 1
        %s177 = scalar_select %p176, %s173, 1
        %s178 = smul.addr %s175, 10
        %s179 = sadd.s32 %s177, %s178
        %s180 = smul.addr %s179, 4
        %s181 = scalar_lea.vmem %s0, %s180
        %s182 = smul.u32 2, %s19
      $region32: #{upsample_forward.1} parent=27 // pred_fallthru
        _
    $region28: #{upsample_forward.1} parent=5 // pred_fallthru
      _
    %p183 = scmp.le.s32.totalorder 1, %s11
    %p184 = scmp.lt.s32.totalorder %s11, 3
    %p185 = pnand %p183, %p184
    %p186 = pneg %p185
    // Predicated region
    $region33: #{upsample_forward.1} parent=5 // pred_check
      _
    $region34: #{upsample_forward.1} parent=5 // pred_check_branch
      %188 = sbr.rel (%p185) target = $region36
    $region35: #{upsample_forward.1} parent=5 // pred_region
      %s189 = ssub.s32 %s11, 1
      %s190 = smul.u32 2, %s21
      %p191 = scmp.lt.s32.totalorder %s20, 1
      %s192 = scalar_select %p191, %s20, 1
      %p193 = scmp.lt.s32.totalorder %s190, 1
      %s194 = scalar_select %p193, %s190, 1
      %s195 = smul.addr %s192, 10
      %s196 = sadd.s32 %s194, %s195
      %s197 = smul.addr %s196, 4
      %s198 = scalar_lea.vmem %s0, %s197
      %p199 = pneg %p51
      %p200 = pneg %p48
      %p201 = pneg %p72
      %p202 = pneg %p69
      %p203 = pneg %p93
      %p204 = pneg %p90
      %p205 = pneg %p114
      %p206 = pneg %p111
      %p207 = pneg %p142
      %p208 = pneg %p139
      %s209 = smul.u32 2, %s21
      %p210 = scmp.lt.s32.totalorder %s20, 1
      %s211 = scalar_select %p210, %s20, 1
      %p212 = scmp.lt.s32.totalorder %s209, 1
      %s213 = scalar_select %p212, %s209, 1
      %s214 = smul.addr %s211, 4
      %s215 = sadd.s32 %s213, %s214
      %s216 = smul.addr %s215, 8
      %s217 = scalar_lea.vmem %s4, %s216
      %s218 = smul.u32 2, %s21
      %p219 = scmp.lt.s32.totalorder %s20, 1
      %s220 = scalar_select %p219, %s20, 1
      %p221 = scmp.lt.s32.totalorder %s218, 1
      %s222 = scalar_select %p221, %s218, 1
      %s223 = smul.addr %s220, 10
      %s224 = sadd.s32 %s222, %s223
      %s225 = smul.addr %s224, 4
      %s226 = scalar_lea.vmem %s0, %s225
      %s227 = smul.u32 2, %s21
      %s228 = smul.u32 2, %s21
      %p229 = scmp.lt.s32.totalorder %s20, 1
      %s230 = scalar_select %p229, %s20, 1
      %p231 = scmp.lt.s32.totalorder %s228, 1
      %s232 = scalar_select %p231, %s228, 1
      %s233 = smul.addr %s230, 4
      %s234 = sadd.s32 %s232, %s233
      %s235 = smul.addr %s234, 8
      %s236 = scalar_lea.vmem %s4, %s235
      %s237 = smul.u32 2, %s21
      %v239 = vld [vmem:[%s1] sm:$0xf]
      %v240 = vld [vmem:[%s1 + $0x4] sm:$0xf]
      %v241 = vld [vmem:[%s226] sm:$0xff]
      %v242 = vld [vmem:[%s226 + $0x8] sm:$0xff]
      %v243 = vld [vmem:[%s226 + $0x10] sm:$0xff]
      %v244 = vld [vmem:[%s226 + $0x18] sm:$0xff]
      %v245 = vld [vmem:[%s226 + $0x20] sm:$0x33]
      %v246 = vld [vmem:[%s2] sm:$0xff]
      %v247 = vld [vmem:[%s2 + $0x8] sm:$0xff]
      %249 = vset.pattern.permute.xlu0 0
      %250 = vperm.xlu0 %249, %v246
      %v251 = vpop.permute.xlu0 %250
      %254 = vset.pattern.permute.xlu0 0
      %255 = vperm.xlu0 %254, %v247
      %v256 = vpop.permute.xlu0 %255
      %v260 = vunpack.c.l.b16 %v239
      %v261 = vunpack.c.l.b16 %v240
      %v262 = vpack.c.b16 %v261, %v260
      %v268 = vunpack.c.l.b16 %v241
      %v269 = vunpack.c.h.b16 %v241
      %v270 = vunpack.c.l.b16 %v242
      %v271 = vunpack.c.h.b16 %v242
      %v272 = vunpack.c.l.b16 %v243
      %v273 = vunpack.c.h.b16 %v243
      %v274 = vunpack.c.l.b16 %v244
      %v275 = vunpack.c.h.b16 %v244
      %v276 = vunpack.c.l.b16 %v245
      %v277 = vunpack.c.h.b16 %v245
      %v278 = vpack.c.b16 %v270, %v268
      %v279 = vpack.c.b16 %v271, %v269
      %v280 = vpack.c.b16 %v274, %v272
      %v281 = vpack.c.b16 %v275, %v273
      %v282 = vpack.c.b16 %v276, %v276
      %v283 = vpack.c.b16 %v277, %v277
      %vm288 = vcmask 293888
      %v290 = vsel %vm288, %v262, 0
      %vm292 = vcmask 1041408
      %v294 = vsel %vm292, %v282, 0
      %v297 = vsel %vm292, %v283, 0
      %299 = vmatpush.bf16.msra.mxu0 0
      %300 = vmatpush.bf16.msra.mxu0 0
      %301 = vmatpush.bf16.msra.mxu0 0
      %302 = vmatpush.bf16.msra.mxu0 0
      %303 = vmatpush.bf16.msra.mxu0 0
      %304 = vmatpush.bf16.msra.mxu0 %v294
      %305 = vmatpush.bf16.msra.mxu0 %v280
      %306 = vmatpush.bf16.msra.mxu0 %v278
      %307 = vmatmul.bf16.gmra.mxu0 %v290
      %v308 = vpop.f32.mrf.mxu0
      %v309 = vadd.f32 %v251, %v308
      %v310 = vpop.f32.mrf.mxu0
      %v311 = vadd.f32 %v256, %v310
      %312 = vdwg.mxu0
      %313 = vmatpush.bf16.msra.mxu0 0
      %314 = vmatpush.bf16.msra.mxu0 0
      %315 = vmatpush.bf16.msra.mxu0 0
      %316 = vmatpush.bf16.msra.mxu0 0
      %317 = vmatpush.bf16.msra.mxu0 0
      %318 = vmatpush.bf16.msra.mxu0 %v297
      %319 = vmatpush.bf16.msra.mxu0 %v281
      %320 = vmatpush.bf16.msra.mxu0 %v279
      %321 = vmatmul.bf16.gmra.mxu0 %v290
      %v322 = vpop.f32.mrf.mxu0
      %v323 = vadd.f32 %v251, %v322
      %v324 = vpop.f32.mrf.mxu0
      %v325 = vadd.f32 %v256, %v324
      %326 = vdwg.mxu0
      %s327 = sld [smem:[#allocation2]]
      %vm328 = vcmp.ge.f32.partialorder %v309, 0.0
      %vm329 = vcmp.ge.f32.partialorder %v323, 0.0
      %vm330 = vcmp.ge.f32.partialorder %v311, 0.0
      %vm331 = vcmp.ge.f32.partialorder %v325, 0.0
      %v332 = vstv %s327
      %v333 = vmul.f32 %v332, %v309
      %v334 = vmul.f32 %v332, %v323
      %v335 = vmul.f32 %v332, %v311
      %v336 = vmul.f32 %v332, %v325
      %v337 = vsel %vm328, %v309, %v333
      %v338 = vsel %vm329, %v323, %v334
      %v339 = vsel %vm330, %v311, %v335
      %v340 = vsel %vm331, %v325, %v336
      %341 = vst [vmem:[%s236] sm:$0xff] %v337
      %342 = vst [vmem:[%s236 + $0x8] sm:$0xff] %v338
      %343 = vst [vmem:[%s236 + $0x10] sm:$0xff] %v339
      %344 = vst [vmem:[%s236 + $0x18] sm:$0xff] %v340
      %s345 = smul.u32 2, %s21
      %p346 = scmp.lt.s32.totalorder %s20, 1
      %s347 = scalar_select %p346, %s20, 1
      %p348 = scmp.lt.s32.totalorder %s345, 1
      %s349 = scalar_select %p348, %s345, 1
      %s350 = smul.addr %s347, 4
      %s351 = sadd.s32 %s349, %s350
      %s352 = smul.addr %s351, 8
      %s353 = scalar_lea.vmem %s4, %s352
      // Predicated region
      $region37: #{upsample_forward.1} parent=35 // pred_check
        %p354 = pneg %p139
      $region38: #{upsample_forward.1} parent=35 // pred_check_branch
        %356 = sbr.rel (%p354) target = $region40
      $region39: #{upsample_forward.1} parent=35 // pred_region
        %s357 = smul.u32 2, %s21
      $region40: #{upsample_forward.1} parent=35 // pred_fallthru
        _
    $region36: #{upsample_forward.1} parent=5 // pred_fallthru
      _
    %p358 = scmp.le.s32.totalorder 2, %s11
    // Predicated region
    $region41: #{upsample_forward.1} parent=5 // pred_check
      %p359 = pneg %p358
    $region42: #{upsample_forward.1} parent=5 // pred_check_branch
      %361 = sbr.rel (%p359) target = $region44
    $region43: #{upsample_forward.1} parent=5 // pred_region
      %s362 = ssub.s32 %s11, 2
      // Predicated region
      $region45: #{upsample_forward.1} parent=43 // pred_check
        %p363 = pneg %p145
      $region46: #{upsample_forward.1} parent=43 // pred_check_branch
        %365 = sbr.rel (%p363) target = $region48
      $region47: #{upsample_forward.1} parent=43 // pred_region
        %s366 = smul.u32 2, %s23
        %p367 = scmp.lt.s32.totalorder %s22, 1
        %s368 = scalar_select %p367, %s22, 1
        %p369 = scmp.lt.s32.totalorder %s366, 1
        %s370 = scalar_select %p369, %s366, 1
        %s371 = smul.addr %s368, 4
        %s372 = sadd.s32 %s370, %s371
        %s373 = smul.addr %s372, 8
        %s374 = scalar_lea.vmem %s4, %s373
      $region48: #{upsample_forward.1} parent=43 // pred_fallthru
        _
    $region44: #{upsample_forward.1} parent=5 // pred_fallthru
      _
  $region6: #{upsample_forward.1} parent=0 // loop_footer
    %s15 = sadd.s32 1, %s11
  $region7: #{upsample_forward.1} parent=0 // loop_footer_branch
    %10 = sbr.rel target = $region3
  $region8: #{upsample_forward.1} parent=0 // loop_exit
    _

</llo_original>
